<compile_context>
chip_gen: v7x
topology: tpu7x:2x2x1
jax: 0.10.0
libtpu: 0.0.40
codegen_flags: <defaults>
</compile_context>

<pallas_src>
import jax
import jax.numpy as jnp
from jax.experimental import pallas as pl
from jax.experimental.pallas import tpu as pltpu


def _mlp_kernel(xg_ref, xd_ref, w1g_ref, w1d_ref, b1_ref, w2_ref, o_ref):
    # xg_ref, xd_ref : (TE, H)  bf16   -- gathered gene / disease features
    # w1g_ref, w1d_ref: (H, H)  bf16   -- two halves of lin1 weight, [in, out]
    # b1_ref        : (1, H)   f32
    # w2_ref        : (1, H)   f32     -- lin2 weight as a row vector
    # o_ref         : (TE, 1)  f32
    h = jnp.dot(xg_ref[...], w1g_ref[...], preferred_element_type=jnp.float32)
    h = h + jnp.dot(xd_ref[...], w1d_ref[...], preferred_element_type=jnp.float32)
    h = jnp.maximum(h + b1_ref[...], 0.0)                     # bias + ReLU (f32)
    # Second layer (output width 1): VPU multiply + lane reduction.
    o = jnp.sum(h * w2_ref[...], axis=-1, keepdims=True)      # (TE, 1)
    o_ref[...] = o.astype(o_ref.dtype)


def link_predictor_pallas(x_gene, x_disease, edge_label_index, params,
                          *, tile_e=2048):
    """Pallas implementation of LinkPredictor.forward."""
    w1, b1, w2, b2 = params          # w1: [2H, H], b1: [H], w2: [H, 1], b2: [1]
    H = w1.shape[1]
    row, col = edge_label_index[0], edge_label_index[1]

    # Gather the two halves separately (no [E, 2H] concat copy) and stream
    # them as bf16; f32 accumulation happens inside the kernel.
    xg = x_gene[row].astype(jnp.bfloat16)        # [E, H]
    xd = x_disease[col].astype(jnp.bfloat16)     # [E, H]
    E = xg.shape[0]

    # Keep the edge tile a sublane multiple of 8 and no larger than needed.
    # No explicit padding: the grid is ragged (pl.cdiv) and Pallas pads reads /
    # masks writes of the last partial block.
    tile_e = max(8, min(tile_e, ((E + 7) // 8) * 8))
    grid = (pl.cdiv(E, tile_e),)

    w1g = w1[:H].astype(jnp.bfloat16)            # [H, H]
    w1d = w1[H:].astype(jnp.bfloat16)            # [H, H]
    b1_2d = b1.reshape(1, H).astype(jnp.float32)
    w2_row = w2.reshape(1, H).astype(jnp.float32)

    out = pl.pallas_call(
        _mlp_kernel,
        out_shape=jax.ShapeDtypeStruct((E, 1), jnp.float32),
        grid_spec=pltpu.PrefetchScalarGridSpec(
            num_scalar_prefetch=0,
            grid=grid,
            in_specs=[
                pl.BlockSpec((tile_e, H), lambda i: (i, 0)),   # xg tile
                pl.BlockSpec((tile_e, H), lambda i: (i, 0)),   # xd tile
                pl.BlockSpec((H, H), lambda i: (0, 0)),        # w1 (gene half)
                pl.BlockSpec((H, H), lambda i: (0, 0)),        # w1 (disease half)
                pl.BlockSpec((1, H), lambda i: (0, 0)),        # b1
                pl.BlockSpec((1, H), lambda i: (0, 0)),        # w2 row
            ],
            out_specs=pl.BlockSpec((tile_e, 1), lambda i: (i, 0)),
        ),
        compiler_params=pltpu.CompilerParams(
            dimension_semantics=("parallel",)),
        # Note: for very large tile_e / H on v5e, raise vmem_limit_bytes; the
        # defaults here keep resident buffers well under the 16 MiB scoped min.
    )(xg, xd, w1g, w1d, b1_2d, w2_row)

    # squeeze() + scalar bias b2 folded in outside the kernel.
    return out[:E, 0] + b2[0]


def init_params(key, hidden_channels):
    """Deterministic init mimicking torch.nn.Linear (uniform +-1/sqrt(fan_in))."""
    k1, k2, k3, k4 = jax.random.split(key, 4)
    fan1 = 2 * hidden_channels
    fan2 = hidden_channels
    lim1 = 1.0 / jnp.sqrt(fan1)
    lim2 = 1.0 / jnp.sqrt(fan2)
    # Stored as [in, out] (transposed vs. PyTorch's [out, in]).
    w1 = jax.random.uniform(k1, (fan1, hidden_channels), jnp.float32, -lim1, lim1)
    b1 = jax.random.uniform(k2, (hidden_channels,), jnp.float32, -lim1, lim1)
    w2 = jax.random.uniform(k3, (hidden_channels, 1), jnp.float32, -lim2, lim2)
    b2 = jax.random.uniform(k4, (1,), jnp.float32, -lim2, lim2)
    return w1, b1, w2, b2


def reference_forward_bf16(x_gene, x_disease, edge_label_index, params):
    """Pure-JAX reference following the same bf16-streaming numerics."""
    w1, b1, w2, b2 = params
    H = w1.shape[1]
    row, col = edge_label_index[0], edge_label_index[1]
    xg = x_gene[row].astype(jnp.bfloat16).astype(jnp.float32)
    xd = x_disease[col].astype(jnp.bfloat16).astype(jnp.float32)
    w1g = w1[:H].astype(jnp.bfloat16).astype(jnp.float32)
    w1d = w1[H:].astype(jnp.bfloat16).astype(jnp.float32)
    h = jnp.maximum(xg @ w1g + xd @ w1d + b1, 0.0)
    return (h @ w2 + b2)[:, 0]


def reference_forward_f32(x_gene, x_disease, edge_label_index, params):
    w1, b1, w2, b2 = params
    row, col = edge_label_index[0], edge_label_index[1]
    x = jnp.concatenate([x_gene[row], x_disease[col]], axis=-1)
    h = jnp.maximum(x @ w1 + b1, 0.0)
    return (h @ w2 + b2)[:, 0]


if __name__ == "__main__":
    hidden = 32
    n_gene, n_disease, n_edges = 16, 16, 8

    key = jax.random.PRNGKey(0)
    kg, kd, ke, kp = jax.random.split(key, 4)

    x_gene = jax.random.normal(kg, (n_gene, hidden), jnp.float32)
    x_disease = jax.random.normal(kd, (n_disease, hidden), jnp.float32)
    edge_label_index = jnp.stack([
        jax.random.randint(ke, (n_edges,), 0, n_gene),
        jax.random.randint(jax.random.fold_in(ke, 1), (n_edges,), 0, n_disease),
    ])  # [2, E], int32

    params = init_params(kp, hidden)

    out = link_predictor_pallas(x_gene, x_disease, edge_label_index, params)
    out = jax.block_until_ready(out)

    ref_bf16 = reference_forward_bf16(x_gene, x_disease, edge_label_index, params)
    ref_f32 = reference_forward_f32(x_gene, x_disease, edge_label_index, params)

    assert out.shape == (n_edges,)
    # Tight check against a reference using the same bf16 streaming numerics.
    assert jnp.allclose(out, ref_bf16, atol=1e-3, rtol=1e-3)
    # Loose check against the full-f32 module semantics.
    assert jnp.allclose(out, ref_f32, atol=5e-2, rtol=5e-2)

    print("KERNEL_OK")
</pallas_src>

<mosaic_0001>
module attributes {stable_mosaic.version = 11 : i64} {
  func.func @_mlp_kernel(%arg0: i32, %arg1: memref<8x32xbf16, #tpu.memory_space<vmem>>, %arg2: memref<8x32xbf16, #tpu.memory_space<vmem>>, %arg3: memref<32x32xbf16, #tpu.memory_space<vmem>>, %arg4: memref<32x32xbf16, #tpu.memory_space<vmem>>, %arg5: memref<1x32xf32, #tpu.memory_space<vmem>>, %arg6: memref<1x32xf32, #tpu.memory_space<vmem>>, %arg7: memref<8x1xf32, #tpu.memory_space<vmem>>) attributes {dimension_semantics = [#tpu.dimension_semantics<parallel>], iteration_bounds = array<i64: 1>, scalar_prefetch = 0 : i64, scratch_operands = 0 : i64, tpu.core_type = #tpu.core_type<tc>, window_params = [{transform_indices = @transform_0, window_bounds = array<i64: 8, 32>}, {transform_indices = @transform_1, window_bounds = array<i64: 8, 32>}, {pipeline_mode = #tpu.pipeline_mode<synchronous>, transform_indices = @transform_2, window_bounds = array<i64: 32, 32>}, {pipeline_mode = #tpu.pipeline_mode<synchronous>, transform_indices = @transform_3, window_bounds = array<i64: 32, 32>}, {pipeline_mode = #tpu.pipeline_mode<synchronous>, transform_indices = @transform_4, window_bounds = array<i64: 1, 32>}, {pipeline_mode = #tpu.pipeline_mode<synchronous>, transform_indices = @transform_5, window_bounds = array<i64: 1, 32>}, {transform_indices = @transform_6, window_bounds = array<i64: 8, 1>}]} {
    %c0 = arith.constant 0 : index
    %c0_0 = arith.constant 0 : index
    %0 = vector.load %arg1[%c0, %c0_0] : memref<8x32xbf16, #tpu.memory_space<vmem>>, vector<8x32xbf16>
    %c0_1 = arith.constant 0 : index
    %c0_2 = arith.constant 0 : index
    %1 = vector.load %arg3[%c0_1, %c0_2] : memref<32x32xbf16, #tpu.memory_space<vmem>>, vector<32x32xbf16>
    %cst = arith.constant dense<0.000000e+00> : vector<8x32xf32>
    %2 = tpu.matmul %0, %1, %cst {dimension_numbers = #tpu.dot_dimension_numbers<[1], [0], [0], [1], [0, 0, 1, 1], [], []>} : vector<8x32xbf16>, vector<32x32xbf16>, vector<8x32xf32> -> vector<8x32xf32>
    %c0_3 = arith.constant 0 : index
    %c0_4 = arith.constant 0 : index
    %3 = vector.load %arg2[%c0_3, %c0_4] : memref<8x32xbf16, #tpu.memory_space<vmem>>, vector<8x32xbf16>
    %c0_5 = arith.constant 0 : index
    %c0_6 = arith.constant 0 : index
    %4 = vector.load %arg4[%c0_5, %c0_6] : memref<32x32xbf16, #tpu.memory_space<vmem>>, vector<32x32xbf16>
    %cst_7 = arith.constant dense<0.000000e+00> : vector<8x32xf32>
    %5 = tpu.matmul %3, %4, %cst_7 {dimension_numbers = #tpu.dot_dimension_numbers<[1], [0], [0], [1], [0, 0, 1, 1], [], []>} : vector<8x32xbf16>, vector<32x32xbf16>, vector<8x32xf32> -> vector<8x32xf32>
    %6 = arith.addf %2, %5 : vector<8x32xf32>
    %c0_8 = arith.constant 0 : index
    %c0_9 = arith.constant 0 : index
    %7 = vector.load %arg5[%c0_8, %c0_9] : memref<1x32xf32, #tpu.memory_space<vmem>>, vector<1x32xf32>
    %8 = vector.broadcast %7 : vector<1x32xf32> to vector<8x32xf32>
    %9 = arith.addf %6, %8 : vector<8x32xf32>
    %cst_10 = arith.constant 0.000000e+00 : f32
    %10 = vector.broadcast %cst_10 : f32 to vector<8x32xf32>
    %11 = arith.maximumf %9, %10 : vector<8x32xf32>
    %c0_11 = arith.constant 0 : index
    %c0_12 = arith.constant 0 : index
    %12 = vector.load %arg6[%c0_11, %c0_12] : memref<1x32xf32, #tpu.memory_space<vmem>>, vector<1x32xf32>
    %13 = vector.broadcast %12 : vector<1x32xf32> to vector<8x32xf32>
    %14 = arith.mulf %11, %13 : vector<8x32xf32>
    %cst_13 = arith.constant dense<0.000000e+00> : vector<8xf32>
    %15 = vector.multi_reduction <add>, %14, %cst_13 [1] : vector<8x32xf32> to vector<8xf32>
    %16 = vector.shape_cast %15 : vector<8xf32> to vector<8x1xf32>
    %c0_14 = arith.constant 0 : index
    %c0_15 = arith.constant 0 : index
    %17 = vector.load %arg7[%c0_14, %c0_15] : memref<8x1xf32, #tpu.memory_space<vmem>>, vector<8x1xf32>
    tpu.vector_store %arg7[%c0_14, %c0_15], %16 {strides = array<i32>} : memref<8x1xf32, #tpu.memory_space<vmem>>, vector<8x1xf32>,
    return
  }
  func.func @transform_0(%arg0: i32) -> (i32, i32) {
    %c0_i32 = arith.constant 0 : i32
    %c0_i32_0 = arith.constant 0 : i32
    return %arg0, %c0_i32 : i32, i32
  }
  func.func @transform_1(%arg0: i32) -> (i32, i32) {
    %c0_i32 = arith.constant 0 : i32
    %c0_i32_0 = arith.constant 0 : i32
    return %arg0, %c0_i32 : i32, i32
  }
  func.func @transform_2(%arg0: i32) -> (i32, i32) {
    %c0_i32 = arith.constant 0 : i32
    %c0_i32_0 = arith.constant 0 : i32
    %c0_i32_1 = arith.constant 0 : i32
    return %c0_i32, %c0_i32_0 : i32, i32
  }
  func.func @transform_3(%arg0: i32) -> (i32, i32) {
    %c0_i32 = arith.constant 0 : i32
    %c0_i32_0 = arith.constant 0 : i32
    %c0_i32_1 = arith.constant 0 : i32
    return %c0_i32, %c0_i32_0 : i32, i32
  }
  func.func @transform_4(%arg0: i32) -> (i32, i32) {
    %c0_i32 = arith.constant 0 : i32
    %c0_i32_0 = arith.constant 0 : i32
    %c0_i32_1 = arith.constant 0 : i32
    return %c0_i32, %c0_i32_0 : i32, i32
  }
  func.func @transform_5(%arg0: i32) -> (i32, i32) {
    %c0_i32 = arith.constant 0 : i32
    %c0_i32_0 = arith.constant 0 : i32
    %c0_i32_1 = arith.constant 0 : i32
    return %c0_i32, %c0_i32_0 : i32, i32
  }
  func.func @transform_6(%arg0: i32) -> (i32, i32) {
    %c0_i32 = arith.constant 0 : i32
    %c0_i32_0 = arith.constant 0 : i32
    return %arg0, %c0_i32 : i32, i32
  }
}

</mosaic_0001>

<llo_original>
// kernel: tpu_custom_call.1
$region0: #{tpu_custom_call.1}
  #allocation0 [shape = 'u32[]', space=smem, size = 0x4, offset = 0x4, fixed_abs, tag = 'smem constant byte address 0x4 - core index']
  #allocation1 [shape = 'u32[144,128]{1,0:T(1,128)}', space=vmem, size = 0x12000, scoped, tag = 'internal scratch']
  %s0 = inlined_call_operand.hbm [shape: bf16[8,32], index: 0, kind: input, shape index: {}]
  %s1 = inlined_call_operand.hbm [shape: bf16[8,32], index: 1, kind: input, shape index: {}]
  %s2 = inlined_call_operand.hbm [shape: bf16[32,32], index: 2, kind: input, shape index: {}]
  %s3 = inlined_call_operand.hbm [shape: bf16[32,32], index: 3, kind: input, shape index: {}]
  %s4 = inlined_call_operand.vmem [shape: f32[1,32], index: 4, kind: input, shape index: {}]
  %s5 = inlined_call_operand.vmem [shape: f32[1,32], index: 5, kind: input, shape index: {}]
  %s6 = inlined_call_operand.vmem [shape: f32[8,1], index: 6, kind: output, shape index: {}]
  %s7 = sld [smem:[#allocation0]]
  $region50: #{tpu_custom_call.1} parent=0
    _
  %s9 = ssub.s32 1, %s7
  %s10 = scalar_select 0, %s9, %s7
  $region1: #{tpu_custom_call.1} parent=0
    #allocation2 [shape = 'u8[2048]{0}', space=vmem, size = 0x800, scoped, tag = 'input window, operand 0, single buffered']
    #allocation3 [shape = 's32[1]{0}', space=sflag, size = 0x4, scoped, tag = 'scoped memory for tpu_custom_call.1']
    #allocation4 [shape = 'u8[2048]{0}', space=vmem, size = 0x800, scoped, tag = 'input window, operand 1, single buffered']
    #allocation5 [shape = 's32[1]{0}', space=sflag, size = 0x4, scoped, tag = 'scoped memory for tpu_custom_call.1']
    #allocation6 [shape = 'u8[8192]{0}', space=vmem, size = 0x2000, scoped, tag = 'input window, operand 2, single buffered']
    #allocation7 [shape = 'u8[8192]{0}', space=vmem, size = 0x2000, scoped, tag = 'input window, operand 3, single buffered']
    #allocation8 [shape = 's32[1]{0}', space=sflag, size = 0x4, scoped, tag = 'scoped memory for tpu_custom_call.1']
    %11 = vsyncpa [#allocation3], 0
    %12 = vsyncpa [#allocation5], 0
    %13 = vsyncpa [#allocation8], 0
    // Predicated region
    $region2: #{tpu_custom_call.1} parent=1 // pred_check
      _
    $region3: #{tpu_custom_call.1} parent=1 // pred_check_branch
      %15 = sbr.rel (0) target = $region5
    $region4: #{tpu_custom_call.1} parent=1 // pred_region
      %s17 = ssub.s32 64, 64
      %18 = vsyncadd [#allocation3], %s17
      %s20 = sshll.u32 [#allocation2], 4
      %s21 = int_to_ptr.vmem [resolvable:$true] %s20
      %23 = dma.hbm_to_vmem [thread:$0]  %s0, 64, %s21, [#allocation3]
    $region5: #{tpu_custom_call.1} parent=1 // pred_fallthru
      _
    // Predicated region
    $region6: #{tpu_custom_call.1} parent=1 // pred_check
      _
    $region7: #{tpu_custom_call.1} parent=1 // pred_check_branch
      %25 = sbr.rel (0) target = $region9
    $region8: #{tpu_custom_call.1} parent=1 // pred_region
      %s27 = ssub.s32 64, 64
      %28 = vsyncadd [#allocation5], %s27
      %s30 = sshll.u32 [#allocation4], 4
      %s31 = int_to_ptr.vmem [resolvable:$true] %s30
      %33 = dma.hbm_to_vmem [thread:$0]  %s1, 64, %s31, [#allocation5]
    $region9: #{tpu_custom_call.1} parent=1 // pred_fallthru
      _
    // Predicated region
    $region10: #{tpu_custom_call.1} parent=1 // pred_check
      _
    $region11: #{tpu_custom_call.1} parent=1 // pred_check_branch
      %35 = sbr.rel (0) target = $region13
    $region12: #{tpu_custom_call.1} parent=1 // pred_region
      %s37 = ssub.s32 256, 256
      %38 = vsyncadd [#allocation5], %s37
      %s39 = sshll.u32 [#allocation6], 4
      %s40 = int_to_ptr.vmem [resolvable:$true] %s39
      %45 = dma.hbm_to_vmem [thread:$0]  %s2, 256, %s40, [#allocation5], 64, 64, 4
    $region13: #{tpu_custom_call.1} parent=1 // pred_fallthru
      _
    // Predicated region
    $region14: #{tpu_custom_call.1} parent=1 // pred_check
      _
    $region15: #{tpu_custom_call.1} parent=1 // pred_check_branch
      %47 = sbr.rel (0) target = $region17
    $region16: #{tpu_custom_call.1} parent=1 // pred_region
      %s49 = ssub.s32 256, 256
      %50 = vsyncadd [#allocation8], %s49
      %s51 = sshll.u32 [#allocation7], 4
      %s52 = int_to_ptr.vmem [resolvable:$true] %s51
      %57 = dma.hbm_to_vmem [thread:$0]  %s3, 256, %s52, [#allocation8], 64, 64, 4
    $region17: #{tpu_custom_call.1} parent=1 // pred_fallthru
      _
    // Predicated region
    $region18: #{tpu_custom_call.1} parent=1 // pred_check
      _
    $region19: #{tpu_custom_call.1} parent=1 // pred_check_branch
      %59 = sbr.rel (0) target = $region21
    $region20: #{tpu_custom_call.1} parent=1 // pred_region
      _
    $region21: #{tpu_custom_call.1} parent=1 // pred_fallthru
      _
    // Predicated region
    $region22: #{tpu_custom_call.1} parent=1 // pred_check
      _
    $region23: #{tpu_custom_call.1} parent=1 // pred_check_branch
      %61 = sbr.rel (0) target = $region25
    $region24: #{tpu_custom_call.1} parent=1 // pred_region
      _
    $region25: #{tpu_custom_call.1} parent=1 // pred_fallthru
      _
    // Predicated region
    $region26: #{tpu_custom_call.1} parent=1 // pred_check
      _
    $region27: #{tpu_custom_call.1} parent=1 // pred_check_branch
      %63 = sbr.rel (0) target = $region29
    $region28: #{tpu_custom_call.1} parent=1 // pred_region
      %64 = dma.done [#allocation3], 64
    $region29: #{tpu_custom_call.1} parent=1 // pred_fallthru
      _
    // Predicated region
    $region30: #{tpu_custom_call.1} parent=1 // pred_check
      _
    $region31: #{tpu_custom_call.1} parent=1 // pred_check_branch
      %66 = sbr.rel (0) target = $region33
    $region32: #{tpu_custom_call.1} parent=1 // pred_region
      %67 = dma.done [#allocation5], 64
    $region33: #{tpu_custom_call.1} parent=1 // pred_fallthru
      _
    // Predicated region
    $region34: #{tpu_custom_call.1} parent=1 // pred_check
      _
    $region35: #{tpu_custom_call.1} parent=1 // pred_check_branch
      %69 = sbr.rel (0) target = $region37
    $region36: #{tpu_custom_call.1} parent=1 // pred_region
      %70 = dma.done [#allocation5], 256
    $region37: #{tpu_custom_call.1} parent=1 // pred_fallthru
      _
    // Predicated region
    $region38: #{tpu_custom_call.1} parent=1 // pred_check
      _
    $region39: #{tpu_custom_call.1} parent=1 // pred_check_branch
      %72 = sbr.rel (0) target = $region41
    $region40: #{tpu_custom_call.1} parent=1 // pred_region
      %73 = dma.done [#allocation8], 256
    $region41: #{tpu_custom_call.1} parent=1 // pred_fallthru
      _
    %v75 = vld [vmem:[#allocation2] sm:$0xf]
    %v76 = vld [vmem:[#allocation6] sm:$0xf]
    %v77 = vld [vmem:[#allocation6 + $0x4] sm:$0xf]
    %v78 = vld [vmem:[#allocation6 + $0x8] sm:$0xf]
    %v79 = vld [vmem:[#allocation6 + $0xc] sm:$0xf]
    %v80 = vld [vmem:[#allocation4] sm:$0xf]
    %v81 = vld [vmem:[#allocation7] sm:$0xf]
    %v82 = vld [vmem:[#allocation7 + $0x4] sm:$0xf]
    %v83 = vld [vmem:[#allocation7 + $0x8] sm:$0xf]
    %v84 = vld [vmem:[#allocation7 + $0xc] sm:$0xf]
    %v89 = vunpack.c.l.b16 %v81
    %v90 = vunpack.c.l.b16 %v82
    %v91 = vunpack.c.l.b16 %v83
    %v92 = vunpack.c.l.b16 %v84
    %v93 = vpack.c.b16 %v90, %v89
    %v94 = vpack.c.b16 %v92, %v91
    %vm97 = vcmask 261120
    %v99 = vsel %vm97, %v80, 0
    %101 = vmatprep.subr.bf16.mxu0 0
    %102 = vmatpush1.bf16.msra.mxu0 %v93
    %103 = vmatprep.subr.bf16.mxu0 0
    %104 = vmatpush1.bf16.msra.mxu0 %v94
    %105 = vmatprep.subr.bf16.mxu0 0
    %106 = vmatpush1.bf16.msra.mxu0 0
    %107 = vmatprep.subr.bf16.mxu0 0
    %108 = vmatpush1.bf16.msra.mxu0 0
    %109 = vmatprep.subr.bf16.mxu0 0
    %110 = vmatpush1.bf16.msra.mxu0 0
    %111 = vmatprep.subr.bf16.mxu0 0
    %112 = vmatpush1.bf16.msra.mxu0 0
    %113 = vmatprep.subr.bf16.mxu0 0
    %114 = vmatpush1.bf16.msra.mxu0 0
    %115 = vmatprep.subr.bf16.mxu0 0
    %116 = vmatpush1.bf16.msra.mxu0 0
    %117 = vmatprep.subr.bf16.mxu0 0
    %118 = vmatpush1.bf16.msra.mxu0 0
    %119 = vmatprep.subr.bf16.mxu0 0
    %120 = vmatpush1.bf16.msra.mxu0 0
    %121 = vmatprep.subr.bf16.mxu0 0
    %122 = vmatpush1.bf16.msra.mxu0 0
    %123 = vmatprep.subr.bf16.mxu0 0
    %124 = vmatpush1.bf16.msra.mxu0 0
    %125 = vmatprep.subr.bf16.mxu0 0
    %126 = vmatpush1.bf16.msra.mxu0 0
    %127 = vmatprep.subr.bf16.mxu0 0
    %128 = vmatpush1.bf16.msra.mxu0 0
    %129 = vmatprep.subr.bf16.mxu0 0
    %130 = vmatpush1.bf16.msra.mxu0 0
    %131 = vmatprep.subr.bf16.mxu0 0
    %132 = vmatpush1.bf16.msra.mxu0 0
    %133 = vmatprep.mubr.bf16.mxu0 0
    %134 = vmatmul.mubr.bf16.gmra.mrb[0].mxu0 %v99
    %v135 = vpop.f32.mrb[0].mxu0
    %v136 = vadd.f32 0.0, %v135
    %v137 = vpop.f32.mrb[0].mxu0
    %v138 = vpop.f32.mrb[0].mxu0
    %v139 = vpop.f32.mrb[0].mxu0
    %140 = vdwg.mxu0
    %v145 = vunpack.c.l.b16 %v76
    %v146 = vunpack.c.l.b16 %v77
    %v147 = vunpack.c.l.b16 %v78
    %v148 = vunpack.c.l.b16 %v79
    %v149 = vpack.c.b16 %v146, %v145
    %v150 = vpack.c.b16 %v148, %v147
    %v154 = vsel %vm97, %v75, 0
    %156 = vmatprep.subr.bf16.mxu0 0
    %157 = vmatpush1.bf16.msra.mxu0 %v149
    %158 = vmatprep.subr.bf16.mxu0 0
    %159 = vmatpush1.bf16.msra.mxu0 %v150
    %160 = vmatprep.subr.bf16.mxu0 0
    %161 = vmatpush1.bf16.msra.mxu0 0
    %162 = vmatprep.subr.bf16.mxu0 0
    %163 = vmatpush1.bf16.msra.mxu0 0
    %164 = vmatprep.subr.bf16.mxu0 0
    %165 = vmatpush1.bf16.msra.mxu0 0
    %166 = vmatprep.subr.bf16.mxu0 0
    %167 = vmatpush1.bf16.msra.mxu0 0
    %168 = vmatprep.subr.bf16.mxu0 0
    %169 = vmatpush1.bf16.msra.mxu0 0
    %170 = vmatprep.subr.bf16.mxu0 0
    %171 = vmatpush1.bf16.msra.mxu0 0
    %172 = vmatprep.subr.bf16.mxu0 0
    %173 = vmatpush1.bf16.msra.mxu0 0
    %174 = vmatprep.subr.bf16.mxu0 0
    %175 = vmatpush1.bf16.msra.mxu0 0
    %176 = vmatprep.subr.bf16.mxu0 0
    %177 = vmatpush1.bf16.msra.mxu0 0
    %178 = vmatprep.subr.bf16.mxu0 0
    %179 = vmatpush1.bf16.msra.mxu0 0
    %180 = vmatprep.subr.bf16.mxu0 0
    %181 = vmatpush1.bf16.msra.mxu0 0
    %182 = vmatprep.subr.bf16.mxu0 0
    %183 = vmatpush1.bf16.msra.mxu0 0
    %184 = vmatprep.subr.bf16.mxu0 0
    %185 = vmatpush1.bf16.msra.mxu0 0
    %186 = vmatprep.subr.bf16.mxu0 0
    %187 = vmatpush1.bf16.msra.mxu0 0
    %188 = vmatprep.mubr.bf16.mxu0 0
    %189 = vmatmul.mubr.bf16.gmra.mrb[0].mxu0 %v154
    %v190 = vpop.f32.mrb[0].mxu0
    %v191 = vadd.f32 %v136, %v190
    %v192 = vpop.f32.mrb[0].mxu0
    %v193 = vpop.f32.mrb[0].mxu0
    %v194 = vpop.f32.mrb[0].mxu0
    %195 = vdwg.mxu0
    %v196 = vld [vmem:[%s4] sm:$0x1]
    %v198 = vlaneseq
    %v199 = vshrl.u32 %v198, 7
    %v200 = vsub.s32 0, %v199
    %v201 = vrot.slane %v196, %v200
    %v203 = vadd.f32 %v191, %v201
    %v204 = vmax.f32 %v203, 0.0
    %v205 = vld [vmem:[%s5] sm:$0x1]
    %v207 = vlaneseq
    %v208 = vshrl.u32 %v207, 7
    %v209 = vsub.s32 0, %v208
    %v210 = vrot.slane %v205, %v209
    %v212 = vmul.f32 %v204, %v210
    %v213 = vsel %vm97, %v212, 0.0
    %214 = vadd.xlane.f32.xlu0 %v213
    %v215 = vpop.xlane.xlu0 %214
    %vm216 = vcmask 7168
    %217 = vst.msk [vmem:[%s6] sm:$0xff] %vm216, %v215
    // Predicated region
    $region42: #{tpu_custom_call.1} parent=1 // pred_check
      _
    $region43: #{tpu_custom_call.1} parent=1 // pred_check_branch
      %219 = sbr.rel (0) target = $region45
    $region44: #{tpu_custom_call.1} parent=1 // pred_region
      _
    $region45: #{tpu_custom_call.1} parent=1 // pred_fallthru
      _
    // Predicated region
    $region46: #{tpu_custom_call.1} parent=1 // pred_check
      _
    $region47: #{tpu_custom_call.1} parent=1 // pred_check_branch
      %221 = sbr.rel (0) target = $region49
    $region48: #{tpu_custom_call.1} parent=1 // pred_region
      _
    $region49: #{tpu_custom_call.1} parent=1 // pred_fallthru
      _
    %222 = vsyncpa [#allocation3], 1
    %223 = vsyncpa [#allocation5], 1
    %224 = vsyncpa [#allocation8], 1

</llo_original>
